<compile_context>
chip_gen: v7x
topology: tpu7x:2x2x1
jax: 0.10.0
libtpu: 0.0.40
codegen_flags: <defaults>
</compile_context>

<pallas_src>
from functools import partial

import jax
import jax.numpy as jnp
import numpy as np
from jax.experimental import pallas as pl
from jax.experimental.pallas import tpu as pltpu

SMOOTH = 1e-5


def _fold_lanes(x, lw):
    """Reduce (C, TP) to (C, lw) lane-partial sums using only lane-aligned VPU adds."""
    tp = x.shape[1]
    if tp == lw:
        return x
    assert tp % lw == 0
    acc = x[:, :lw]
    for i in range(1, tp // lw):
        acc = acc + x[:, i * lw:(i + 1) * lw]
    return acc


def _gdice_partial_kernel(x_ref, lab_ref, ts_out, it_out, ps_out,
                          ts_acc, it_acc, ps_acc, *, hw, lw):
    t = pl.program_id(1)

    @pl.when(t == 0)
    def _():
        ts_acc[...] = jnp.zeros_like(ts_acc)
        it_acc[...] = jnp.zeros_like(it_acc)
        ps_acc[...] = jnp.zeros_like(ps_acc)

    x = x_ref[...]                                      # (C, TP) f32
    lab = lab_ref[...]                                  # (1, TP) i32
    C, TP = x.shape

    has_tail = (hw % TP) != 0                           # static Python bool
    if has_tail:
        col = jax.lax.broadcasted_iota(jnp.int32, (1, TP), 1) + t * TP
        valid = col < hw                                # (1, TP) bool
        x = jnp.where(valid, x, 0.0)                    # NaN-safe for OOB garbage
        lab = jnp.where(valid, lab, -1)                 # no spurious one-hot hits
        validf = valid.astype(jnp.float32)

    # Numerically stable softmax over the channel (sublane) axis.
    m = jnp.max(x, axis=0, keepdims=True)               # (1, TP)
    e = jnp.exp(x - m)                                  # (C, TP)
    s = jnp.sum(e, axis=0, keepdims=True)               # (1, TP)
    inv = pl.reciprocal(s, approx=False)                # EUP; exact (keeps 1e-5 tol)
    if has_tail:
        inv = inv * validf                              # fold mask into (1, TP) factor
    prob = e * inv                                      # (C, TP)

    cls = jax.lax.broadcasted_iota(jnp.int32, (C, TP), 0)
    onehot = (lab == cls).astype(jnp.float32)           # (C, TP); padded cols -> 0

    # Lane-partial accumulation (VPU only); cross-lane reduce deferred to finalize.
    ts_acc[...] += _fold_lanes(onehot, lw)               # target_sum partials
    it_acc[...] += _fold_lanes(prob * onehot, lw)        # intersect partials
    ps_acc[...] += _fold_lanes(prob, lw)                 # prob-sum partials (dn = ps+ts)

    @pl.when(t == pl.num_programs(1) - 1)
    def _():
        ts_out[...] = jnp.sum(ts_acc[...], axis=1, keepdims=True)   # (C, 1)
        it_out[...] = jnp.sum(it_acc[...], axis=1, keepdims=True)
        ps_out[...] = jnp.sum(ps_acc[...], axis=1, keepdims=True)


def _pick_tile(hw, requested):
    """Lane tile: the full spatial extent if it fits, else a multiple of 128."""
    if hw <= requested:
        return hw
    return max(128, (requested // 128) * 128)


def loss_model_pallas(logit, label, tile=4096):
    """logit: (N, C, H, W) float, label: (N, H, W) int class indices."""
    N, C, H, W = logit.shape
    HW = H * W

    # Free reshapes only — no transpose, no pad, no extra HBM pass.
    x = logit.reshape(N, C, HW).astype(jnp.float32)
    lab = label.reshape(N, 1, HW).astype(jnp.int32)

    tile = _pick_tile(HW, int(tile))        # sweep 2048-8192 for large HW
    T = pl.cdiv(HW, tile)
    lw = 128 if tile % 128 == 0 else tile   # lane width of VMEM accumulators

    kern = partial(_gdice_partial_kernel, hw=HW, lw=lw)

    ts_p, it_p, ps_p = pl.pallas_call(
        kern,
        out_shape=(
            jax.ShapeDtypeStruct((N, C, 1), jnp.float32),
            jax.ShapeDtypeStruct((N, C, 1), jnp.float32),
            jax.ShapeDtypeStruct((N, C, 1), jnp.float32),
        ),
        grid_spec=pltpu.PrefetchScalarGridSpec(
            num_scalar_prefetch=0,
            grid=(N, T),                                   # reduction axis (tiles) last
            in_specs=[
                pl.BlockSpec((None, C, tile), lambda n, t: (n, 0, t)),
                pl.BlockSpec((None, 1, tile), lambda n, t: (n, 0, t)),
            ],
            out_specs=[
                pl.BlockSpec((None, C, 1), lambda n, t: (n, 0, 0)),
                pl.BlockSpec((None, C, 1), lambda n, t: (n, 0, 0)),
                pl.BlockSpec((None, C, 1), lambda n, t: (n, 0, 0)),
            ],
            scratch_shapes=[
                pltpu.VMEM((C, lw), jnp.float32),   # target_sum lane partials
                pltpu.VMEM((C, lw), jnp.float32),   # intersect lane partials
                pltpu.VMEM((C, lw), jnp.float32),   # prob-sum lane partials
            ],
        ),
        compiler_params=pltpu.CompilerParams(
            dimension_semantics=("parallel", "arbitrary")),   # batch split across TCs on v7x
    )(x, lab)

    # Tiny trailing finalize in plain JAX (C scalars per quantity).
    ts = jnp.sum(ts_p, axis=(0, 2))
    it = jnp.sum(it_p, axis=(0, 2))
    ps = jnp.sum(ps_p, axis=(0, 2))
    w = 1.0 / jnp.maximum(ts * ts, SMOOTH)
    intersect = jnp.sum(it * w)
    denom = jnp.maximum(jnp.sum((ps + ts) * w), SMOOTH)
    return 1.0 - 2.0 * intersect / denom


def loss_model_reference(logit, label, smooth=SMOOTH):
    """Pure-JAX reference matching torch softmax + GDiceLoss_v2."""
    N, C, H, W = logit.shape
    prob = jax.nn.softmax(logit.astype(jnp.float32), axis=1)
    onehot = jax.nn.one_hot(label, C, axis=1, dtype=jnp.float32)   # (N, C, H, W)
    p = jnp.transpose(prob, (1, 0, 2, 3)).reshape(C, -1)
    t = jnp.transpose(onehot, (1, 0, 2, 3)).reshape(C, -1)
    ts = t.sum(-1)
    w = 1.0 / jnp.maximum(ts * ts, smooth)
    intersect = ((p * t).sum(-1) * w).sum()
    denom = jnp.maximum(((p + t).sum(-1) * w).sum(), smooth)
    return 1.0 - 2.0 * intersect / denom


if __name__ == "__main__":
    key = jax.random.PRNGKey(0)
    k1, k2 = jax.random.split(key)

    N, C, H, W = 2, 4, 16, 16
    logit = jax.random.normal(k1, (N, C, H, W), dtype=jnp.float32)
    label = jax.random.randint(k2, (N, H, W), 0, C, dtype=jnp.int32)

    loss = jax.block_until_ready(loss_model_pallas(logit, label))
    ref = jax.block_until_ready(loss_model_reference(logit, label))

    np.testing.assert_allclose(np.asarray(loss), np.asarray(ref), rtol=1e-5, atol=1e-5)
    print("KERNEL_OK")
</pallas_src>

<mosaic_0001>
module attributes {stable_mosaic.version = 11 : i64} {
  func.func @_gdice_partial_kernel(%arg0: i32, %arg1: i32, %arg2: memref<1x4x256xf32, #tpu.memory_space<vmem>>, %arg3: memref<1x1x256xi32, #tpu.memory_space<vmem>>, %arg4: memref<1x4x1xf32, #tpu.memory_space<vmem>>, %arg5: memref<1x4x1xf32, #tpu.memory_space<vmem>>, %arg6: memref<1x4x1xf32, #tpu.memory_space<vmem>>, %arg7: memref<4x128xf32, #tpu.memory_space<vmem>>, %arg8: memref<4x128xf32, #tpu.memory_space<vmem>>, %arg9: memref<4x128xf32, #tpu.memory_space<vmem>>) attributes {dimension_semantics = [#tpu.dimension_semantics<parallel>, #tpu.dimension_semantics<arbitrary>], iteration_bounds = array<i64: 2, 1>, scalar_prefetch = 0 : i64, scratch_operands = 3 : i64, tpu.core_type = #tpu.core_type<tc>, window_params = [{transform_indices = @transform_0, window_bounds = array<i64: 1, 4, 256>}, {transform_indices = @transform_1, window_bounds = array<i64: 1, 1, 256>}, {transform_indices = @transform_2, window_bounds = array<i64: 1, 4, 1>}, {transform_indices = @transform_3, window_bounds = array<i64: 1, 4, 1>}, {transform_indices = @transform_4, window_bounds = array<i64: 1, 4, 1>}]} {
    %c0_i32 = arith.constant 0 : i32
    %0 = arith.cmpi eq, %arg1, %c0_i32 : i32
    %1 = arith.extui %0 : i1 to i32
    %c0_i32_0 = arith.constant 0 : i32
    %2 = arith.cmpi ne, %1, %c0_i32_0 : i32
    scf.if %2 {
      %cst_21 = arith.constant 0.000000e+00 : f32
      %44 = vector.broadcast %cst_21 : f32 to vector<4x128xf32>
      %c0_22 = arith.constant 0 : index
      %c0_23 = arith.constant 0 : index
      %45 = vector.load %arg7[%c0_22, %c0_23] : memref<4x128xf32, #tpu.memory_space<vmem>>, vector<4x128xf32>
      tpu.vector_store %arg7[%c0_22, %c0_23], %44 {strides = array<i32>} : memref<4x128xf32, #tpu.memory_space<vmem>>, vector<4x128xf32>,
      %cst_24 = arith.constant 0.000000e+00 : f32
      %46 = vector.broadcast %cst_24 : f32 to vector<4x128xf32>
      %c0_25 = arith.constant 0 : index
      %c0_26 = arith.constant 0 : index
      %47 = vector.load %arg8[%c0_25, %c0_26] : memref<4x128xf32, #tpu.memory_space<vmem>>, vector<4x128xf32>
      tpu.vector_store %arg8[%c0_25, %c0_26], %46 {strides = array<i32>} : memref<4x128xf32, #tpu.memory_space<vmem>>, vector<4x128xf32>,
      %cst_27 = arith.constant 0.000000e+00 : f32
      %48 = vector.broadcast %cst_27 : f32 to vector<4x128xf32>
      %c0_28 = arith.constant 0 : index
      %c0_29 = arith.constant 0 : index
      %49 = vector.load %arg9[%c0_28, %c0_29] : memref<4x128xf32, #tpu.memory_space<vmem>>, vector<4x128xf32>
      tpu.vector_store %arg9[%c0_28, %c0_29], %48 {strides = array<i32>} : memref<4x128xf32, #tpu.memory_space<vmem>>, vector<4x128xf32>,
    } else {
    }
    %c0 = arith.constant 0 : index
    %c0_1 = arith.constant 0 : index
    %c0_2 = arith.constant 0 : index
    %3 = vector.load %arg2[%c0, %c0_1, %c0_2] : memref<1x4x256xf32, #tpu.memory_space<vmem>>, vector<1x4x256xf32>
    %4 = vector.shape_cast %3 : vector<1x4x256xf32> to vector<4x256xf32>
    %c0_3 = arith.constant 0 : index
    %c0_4 = arith.constant 0 : index
    %c0_5 = arith.constant 0 : index
    %5 = vector.load %arg3[%c0_3, %c0_4, %c0_5] : memref<1x1x256xi32, #tpu.memory_space<vmem>>, vector<1x1x256xi32>
    %6 = vector.shape_cast %5 : vector<1x1x256xi32> to vector<1x256xi32>
    %cst = arith.constant dense<0xFF800000> : vector<256xf32>
    %7 = vector.multi_reduction <maximumf>, %4, %cst [0] : vector<4x256xf32> to vector<256xf32>
    %8 = vector.shape_cast %7 : vector<256xf32> to vector<1x256xf32>
    %9 = vector.broadcast %8 : vector<1x256xf32> to vector<4x256xf32>
    %10 = arith.subf %4, %9 : vector<4x256xf32>
    %11 = math.exp %10 : vector<4x256xf32>
    %cst_6 = arith.constant dense<0.000000e+00> : vector<256xf32>
    %12 = vector.multi_reduction <add>, %11, %cst_6 [0] : vector<4x256xf32> to vector<256xf32>
    %13 = vector.shape_cast %12 : vector<256xf32> to vector<1x256xf32>
    %14 = tpu.reciprocal %13 : vector<1x256xf32> -> vector<1x256xf32>
    %15 = vector.broadcast %14 : vector<1x256xf32> to vector<4x256xf32>
    %16 = arith.mulf %11, %15 : vector<4x256xf32>
    %17 = tpu.iota {dimensions = array<i32: 0>} : vector<4x256xi32>
    %18 = vector.broadcast %6 : vector<1x256xi32> to vector<4x256xi32>
    %19 = arith.cmpi eq, %18, %17 : vector<4x256xi32>
    %20 = arith.extui %19 : vector<4x256xi1> to vector<4x256xi32>
    %21 = arith.sitofp %20 : vector<4x256xi32> to vector<4x256xf32>
    %c0_7 = arith.constant 0 : index
    %c0_8 = arith.constant 0 : index
    %22 = vector.load %arg7[%c0_7, %c0_8] : memref<4x128xf32, #tpu.memory_space<vmem>>, vector<4x128xf32>
    %23 = vector.extract_strided_slice %21 {offsets = [0, 0], sizes = [4, 128], strides = [1, 1]} : vector<4x256xf32> to vector<4x128xf32>
    %24 = vector.extract_strided_slice %21 {offsets = [0, 128], sizes = [4, 128], strides = [1, 1]} : vector<4x256xf32> to vector<4x128xf32>
    %25 = arith.addf %23, %24 : vector<4x128xf32>
    %26 = arith.addf %22, %25 : vector<4x128xf32>
    %c0_9 = arith.constant 0 : index
    %c0_10 = arith.constant 0 : index
    %27 = vector.load %arg7[%c0_9, %c0_10] : memref<4x128xf32, #tpu.memory_space<vmem>>, vector<4x128xf32>
    tpu.vector_store %arg7[%c0_9, %c0_10], %26 {strides = array<i32>} : memref<4x128xf32, #tpu.memory_space<vmem>>, vector<4x128xf32>,
    %c0_11 = arith.constant 0 : index
    %c0_12 = arith.constant 0 : index
    %28 = vector.load %arg8[%c0_11, %c0_12] : memref<4x128xf32, #tpu.memory_space<vmem>>, vector<4x128xf32>
    %29 = arith.mulf %16, %21 : vector<4x256xf32>
    %30 = vector.extract_strided_slice %29 {offsets = [0, 0], sizes = [4, 128], strides = [1, 1]} : vector<4x256xf32> to vector<4x128xf32>
    %31 = vector.extract_strided_slice %29 {offsets = [0, 128], sizes = [4, 128], strides = [1, 1]} : vector<4x256xf32> to vector<4x128xf32>
    %32 = arith.addf %30, %31 : vector<4x128xf32>
    %33 = arith.addf %28, %32 : vector<4x128xf32>
    %c0_13 = arith.constant 0 : index
    %c0_14 = arith.constant 0 : index
    %34 = vector.load %arg8[%c0_13, %c0_14] : memref<4x128xf32, #tpu.memory_space<vmem>>, vector<4x128xf32>
    tpu.vector_store %arg8[%c0_13, %c0_14], %33 {strides = array<i32>} : memref<4x128xf32, #tpu.memory_space<vmem>>, vector<4x128xf32>,
    %c0_15 = arith.constant 0 : index
    %c0_16 = arith.constant 0 : index
    %35 = vector.load %arg9[%c0_15, %c0_16] : memref<4x128xf32, #tpu.memory_space<vmem>>, vector<4x128xf32>
    %36 = vector.extract_strided_slice %16 {offsets = [0, 0], sizes = [4, 128], strides = [1, 1]} : vector<4x256xf32> to vector<4x128xf32>
    %37 = vector.extract_strided_slice %16 {offsets = [0, 128], sizes = [4, 128], strides = [1, 1]} : vector<4x256xf32> to vector<4x128xf32>
    %38 = arith.addf %36, %37 : vector<4x128xf32>
    %39 = arith.addf %35, %38 : vector<4x128xf32>
    %c0_17 = arith.constant 0 : index
    %c0_18 = arith.constant 0 : index
    %40 = vector.load %arg9[%c0_17, %c0_18] : memref<4x128xf32, #tpu.memory_space<vmem>>, vector<4x128xf32>
    tpu.vector_store %arg9[%c0_17, %c0_18], %39 {strides = array<i32>} : memref<4x128xf32, #tpu.memory_space<vmem>>, vector<4x128xf32>,
    %c0_i32_19 = arith.constant 0 : i32
    %41 = arith.cmpi eq, %arg1, %c0_i32_19 : i32
    %42 = arith.extui %41 : i1 to i32
    %c0_i32_20 = arith.constant 0 : i32
    %43 = arith.cmpi ne, %42, %c0_i32_20 : i32
    scf.if %43 {
      %c0_21 = arith.constant 0 : index
      %c0_22 = arith.constant 0 : index
      %44 = vector.load %arg7[%c0_21, %c0_22] : memref<4x128xf32, #tpu.memory_space<vmem>>, vector<4x128xf32>
      %cst_23 = arith.constant dense<0.000000e+00> : vector<4xf32>
      %45 = vector.multi_reduction <add>, %44, %cst_23 [1] : vector<4x128xf32> to vector<4xf32>
      %46 = vector.shape_cast %45 : vector<4xf32> to vector<4x1xf32>
      %c0_24 = arith.constant 0 : index
      %c0_25 = arith.constant 0 : index
      %c0_26 = arith.constant 0 : index
      %47 = vector.load %arg4[%c0_24, %c0_25, %c0_26] : memref<1x4x1xf32, #tpu.memory_space<vmem>>, vector<1x4x1xf32>
      %48 = vector.shape_cast %47 : vector<1x4x1xf32> to vector<4x1xf32>
      %49 = vector.shape_cast %46 : vector<4x1xf32> to vector<1x4x1xf32>
      tpu.vector_store %arg4[%c0_24, %c0_25, %c0_26], %49 {strides = array<i32>} : memref<1x4x1xf32, #tpu.memory_space<vmem>>, vector<1x4x1xf32>,
      %c0_27 = arith.constant 0 : index
      %c0_28 = arith.constant 0 : index
      %50 = vector.load %arg8[%c0_27, %c0_28] : memref<4x128xf32, #tpu.memory_space<vmem>>, vector<4x128xf32>
      %cst_29 = arith.constant dense<0.000000e+00> : vector<4xf32>
      %51 = vector.multi_reduction <add>, %50, %cst_29 [1] : vector<4x128xf32> to vector<4xf32>
      %52 = vector.shape_cast %51 : vector<4xf32> to vector<4x1xf32>
      %c0_30 = arith.constant 0 : index
      %c0_31 = arith.constant 0 : index
      %c0_32 = arith.constant 0 : index
      %53 = vector.load %arg5[%c0_30, %c0_31, %c0_32] : memref<1x4x1xf32, #tpu.memory_space<vmem>>, vector<1x4x1xf32>
      %54 = vector.shape_cast %53 : vector<1x4x1xf32> to vector<4x1xf32>
      %55 = vector.shape_cast %52 : vector<4x1xf32> to vector<1x4x1xf32>
      tpu.vector_store %arg5[%c0_30, %c0_31, %c0_32], %55 {strides = array<i32>} : memref<1x4x1xf32, #tpu.memory_space<vmem>>, vector<1x4x1xf32>,
      %c0_33 = arith.constant 0 : index
      %c0_34 = arith.constant 0 : index
      %56 = vector.load %arg9[%c0_33, %c0_34] : memref<4x128xf32, #tpu.memory_space<vmem>>, vector<4x128xf32>
      %cst_35 = arith.constant dense<0.000000e+00> : vector<4xf32>
      %57 = vector.multi_reduction <add>, %56, %cst_35 [1] : vector<4x128xf32> to vector<4xf32>
      %58 = vector.shape_cast %57 : vector<4xf32> to vector<4x1xf32>
      %c0_36 = arith.constant 0 : index
      %c0_37 = arith.constant 0 : index
      %c0_38 = arith.constant 0 : index
      %59 = vector.load %arg6[%c0_36, %c0_37, %c0_38] : memref<1x4x1xf32, #tpu.memory_space<vmem>>, vector<1x4x1xf32>
      %60 = vector.shape_cast %59 : vector<1x4x1xf32> to vector<4x1xf32>
      %61 = vector.shape_cast %58 : vector<4x1xf32> to vector<1x4x1xf32>
      tpu.vector_store %arg6[%c0_36, %c0_37, %c0_38], %61 {strides = array<i32>} : memref<1x4x1xf32, #tpu.memory_space<vmem>>, vector<1x4x1xf32>,
    } else {
    }
    return
  }
  func.func @transform_0(%arg0: i32, %arg1: i32) -> (i32, i32, i32) {
    %c0_i32 = arith.constant 0 : i32
    %c0_i32_0 = arith.constant 0 : i32
    return %arg0, %c0_i32, %arg1 : i32, i32, i32
  }
  func.func @transform_1(%arg0: i32, %arg1: i32) -> (i32, i32, i32) {
    %c0_i32 = arith.constant 0 : i32
    %c0_i32_0 = arith.constant 0 : i32
    return %arg0, %c0_i32, %arg1 : i32, i32, i32
  }
  func.func @transform_2(%arg0: i32, %arg1: i32) -> (i32, i32, i32) {
    %c0_i32 = arith.constant 0 : i32
    %c0_i32_0 = arith.constant 0 : i32
    %c0_i32_1 = arith.constant 0 : i32
    return %arg0, %c0_i32, %c0_i32_0 : i32, i32, i32
  }
  func.func @transform_3(%arg0: i32, %arg1: i32) -> (i32, i32, i32) {
    %c0_i32 = arith.constant 0 : i32
    %c0_i32_0 = arith.constant 0 : i32
    %c0_i32_1 = arith.constant 0 : i32
    return %arg0, %c0_i32, %c0_i32_0 : i32, i32, i32
  }
  func.func @transform_4(%arg0: i32, %arg1: i32) -> (i32, i32, i32) {
    %c0_i32 = arith.constant 0 : i32
    %c0_i32_0 = arith.constant 0 : i32
    %c0_i32_1 = arith.constant 0 : i32
    return %arg0, %c0_i32, %c0_i32_0 : i32, i32, i32
  }
}

</mosaic_0001>

<llo_original>
// kernel: tpu_custom_call.1
$region0: #{tpu_custom_call.1}
  #allocation0 [shape = 'u32[]', space=smem, size = 0x4, offset = 0x4, fixed_abs, tag = 'smem constant byte address 0x4 - core index']
  #allocation1 [shape = 'u32[144,128]{1,0:T(1,128)}', space=vmem, size = 0x12000, scoped, tag = 'internal scratch']
  #allocation2 [shape = 'f32[4,128]{1,0:T(4,128)}', space=vmem, size = 0x800, scoped, tag = 'scratch operand']
  #allocation3 [shape = 'f32[4,128]{1,0:T(4,128)}', space=vmem, size = 0x800, scoped, tag = 'scratch operand']
  #allocation4 [shape = 'f32[4,128]{1,0:T(4,128)}', space=vmem, size = 0x800, scoped, tag = 'scratch operand']
  %s0 = inlined_call_operand.hbm [shape: f32[2,4,256], index: 0, kind: input, shape index: {}]
  %s1 = inlined_call_operand.hbm [shape: s32[2,1,256], index: 1, kind: input, shape index: {}]
  %s2 = inlined_call_operand.vmem [shape: f32[2,4,1], index: 2, kind: output, shape index: {0}]
  %s3 = inlined_call_operand.vmem [shape: f32[2,4,1], index: 3, kind: output, shape index: {1}]
  %s4 = inlined_call_operand.vmem [shape: f32[2,4,1], index: 4, kind: output, shape index: {2}]
  %5 = xla_tuple %s2, %s3, %s4
  %s6 = sld [smem:[#allocation0]]
  $region73: #{tpu_custom_call.1} parent=0
    _
  %s8 = ssub.s32 1, %s6
  %s9 = scalar_select 0, %s8, %s6
  $region1: #{tpu_custom_call.1} parent=0
    #allocation5 [shape = 'u8[8192]{0}', space=vmem, size = 0x2000, scoped, tag = 'input window, operand 0']
    #allocation6 [shape = 's32[2]{0}', space=sflag, size = 0x8, scoped, tag = 'scoped memory for tpu_custom_call.1']
    #allocation7 [shape = 'u8[2048]{0}', space=vmem, size = 0x800, scoped, tag = 'input window, operand 1']
    #allocation8 [shape = 's32[2]{0}', space=sflag, size = 0x8, scoped, tag = 'scoped memory for tpu_custom_call.1']
    %10 = vsyncpa [#allocation6], 0
    %s11 = scalar_lea.sflag [#allocation6], 1
    %12 = vsyncpa %s11, 0
    %13 = vsyncpa [#allocation8], 0
    %s14 = scalar_lea.sflag [#allocation8], 1
    %15 = vsyncpa %s14, 0
    loop: start=0, step=1, limit=4
    $region2: #{tpu_custom_call.1} parent=1 // loop_pre_header
      _
    $region3: #{tpu_custom_call.1} parent=1 // loop_header
      %s17 = sphi 0, %s21
      %p18 = scmp.ge.s32.totalorder %s17, 4
      %s24 = sphi 0, %s36
      %s25 = sphi 0, %s32
      %s26 = sphi 0, %s24
      %s27 = sphi 0, %s25
      %s28 = sphi 0, %s26
      %s29 = sphi 0, %s27
      %s41 = sphi 0, %s43
      %s44 = sphi 0, %s41
      %s45 = sphi 0, %s44
      %s61 = sphi 0, %s45
      %s69 = sphi 0, %s71
      %s72 = sphi 0, %s69
      %s73 = sphi 0, %s72
      %s89 = sphi 0, %s73
      %s95 = sphi 0, %s97
      %s98 = sphi 0, %s95
      %s99 = sphi 0, %s98
      %s115 = sphi 0, %s99
      %s121 = sphi 0, %s123
      %s124 = sphi 0, %s121
      %s125 = sphi 0, %s124
      %s141 = sphi 0, %s125
      %s147 = sphi 0, %s149
      %s150 = sphi 0, %s147
      %s151 = sphi 0, %s150
      %s167 = sphi 0, %s151
    $region4: #{tpu_custom_call.1} parent=1 // loop_header_branch
      %20 = sbr.rel (%p18) target = $region8
    $region5: #{tpu_custom_call.1} parent=1 // loop_body
      %s22 = ssub.s32 %s17, 1
      %s23 = ssub.s32 %s17, 2
      %s30 = sadd.s32 1, %s25
      %p31 = scmp.ge.s32.totalorder %s30, 1
      %s32 = scalar_select %p31, 0, %s30
      %s33 = sadd.s32 1, %s24
      %s34 = scalar_select %p31, %s33, %s24
      %p35 = scmp.ge.s32.totalorder %s34, 2
      %s36 = scalar_select %p35, 0, %s34
      %s37 = ssub.s32 %s24, %s36
      %s38 = ssub.s32 %s25, %s32
      %s39 = sor.u32 %s37, %s38
      %p40 = scmp.eq.s32.totalorder %s39, 0
      %s42 = sadd.s32 %s41, 1
      %s43 = scalar_select %p40, %s41, %s42
      %p46 = pneg %p40
      %p47 = scmp.eq.s32.totalorder %s17, 1
      %p48 = por %p46, %p47
      %p49 = scmp.ne.s32.totalorder %s41, %s44
      %p50 = scmp.eq.s32.totalorder %s17, 0
      %p51 = por %p49, %p50
      %p52 = scmp.ne.s32.totalorder %s41, %s44
      %p53 = scmp.eq.s32.totalorder %s22, 1
      %p54 = por %p52, %p53
      %p55 = scmp.ne.s32.totalorder %s44, %s45
      %p56 = scmp.eq.s32.totalorder %s22, 0
      %p57 = por %p55, %p56
      %p58 = scmp.ne.s32.totalorder %s44, %s45
      %p59 = scmp.eq.s32.totalorder %s23, 1
      %p60 = por %p58, %p59
      %p62 = scmp.ne.s32.totalorder %s45, %s61
      %p63 = scmp.eq.s32.totalorder %s23, 0
      %p64 = por %p62, %p63
      %s65 = ssub.s32 %s24, %s36
      %s66 = ssub.s32 %s25, %s32
      %s67 = sor.u32 %s65, %s66
      %p68 = scmp.eq.s32.totalorder %s67, 0
      %s70 = sadd.s32 %s69, 1
      %s71 = scalar_select %p68, %s69, %s70
      %p74 = pneg %p68
      %p75 = scmp.eq.s32.totalorder %s17, 1
      %p76 = por %p74, %p75
      %p77 = scmp.ne.s32.totalorder %s69, %s72
      %p78 = scmp.eq.s32.totalorder %s17, 0
      %p79 = por %p77, %p78
      %p80 = scmp.ne.s32.totalorder %s69, %s72
      %p81 = scmp.eq.s32.totalorder %s22, 1
      %p82 = por %p80, %p81
      %p83 = scmp.ne.s32.totalorder %s72, %s73
      %p84 = scmp.eq.s32.totalorder %s22, 0
      %p85 = por %p83, %p84
      %p86 = scmp.ne.s32.totalorder %s72, %s73
      %p87 = scmp.eq.s32.totalorder %s23, 1
      %p88 = por %p86, %p87
      %p90 = scmp.ne.s32.totalorder %s73, %s89
      %p91 = scmp.eq.s32.totalorder %s23, 0
      %p92 = por %p90, %p91
      %s93 = ssub.s32 %s24, %s36
      %p94 = scmp.eq.s32.totalorder %s93, 0
      %s96 = sadd.s32 %s95, 1
      %s97 = scalar_select %p94, %s95, %s96
      %p100 = pneg %p94
      %p101 = scmp.eq.s32.totalorder %s17, 1
      %p102 = por %p100, %p101
      %p103 = scmp.ne.s32.totalorder %s95, %s98
      %p104 = scmp.eq.s32.totalorder %s17, 0
      %p105 = por %p103, %p104
      %p106 = scmp.ne.s32.totalorder %s95, %s98
      %p107 = scmp.eq.s32.totalorder %s22, 1
      %p108 = por %p106, %p107
      %p109 = scmp.ne.s32.totalorder %s98, %s99
      %p110 = scmp.eq.s32.totalorder %s22, 0
      %p111 = por %p109, %p110
      %p112 = scmp.ne.s32.totalorder %s98, %s99
      %p113 = scmp.eq.s32.totalorder %s23, 1
      %p114 = por %p112, %p113
      %p116 = scmp.ne.s32.totalorder %s99, %s115
      %p117 = scmp.eq.s32.totalorder %s23, 0
      %p118 = por %p116, %p117
      %s119 = ssub.s32 %s24, %s36
      %p120 = scmp.eq.s32.totalorder %s119, 0
      %s122 = sadd.s32 %s121, 1
      %s123 = scalar_select %p120, %s121, %s122
      %p126 = pneg %p120
      %p127 = scmp.eq.s32.totalorder %s17, 1
      %p128 = por %p126, %p127
      %p129 = scmp.ne.s32.totalorder %s121, %s124
      %p130 = scmp.eq.s32.totalorder %s17, 0
      %p131 = por %p129, %p130
      %p132 = scmp.ne.s32.totalorder %s121, %s124
      %p133 = scmp.eq.s32.totalorder %s22, 1
      %p134 = por %p132, %p133
      %p135 = scmp.ne.s32.totalorder %s124, %s125
      %p136 = scmp.eq.s32.totalorder %s22, 0
      %p137 = por %p135, %p136
      %p138 = scmp.ne.s32.totalorder %s124, %s125
      %p139 = scmp.eq.s32.totalorder %s23, 1
      %p140 = por %p138, %p139
      %p142 = scmp.ne.s32.totalorder %s125, %s141
      %p143 = scmp.eq.s32.totalorder %s23, 0
      %p144 = por %p142, %p143
      %s145 = ssub.s32 %s24, %s36
      %p146 = scmp.eq.s32.totalorder %s145, 0
      %s148 = sadd.s32 %s147, 1
      %s149 = scalar_select %p146, %s147, %s148
      %p152 = pneg %p146
      %p153 = scmp.eq.s32.totalorder %s17, 1
      %p154 = por %p152, %p153
      %p155 = scmp.ne.s32.totalorder %s147, %s150
      %p156 = scmp.eq.s32.totalorder %s17, 0
      %p157 = por %p155, %p156
      %p158 = scmp.ne.s32.totalorder %s147, %s150
      %p159 = scmp.eq.s32.totalorder %s22, 1
      %p160 = por %p158, %p159
      %p161 = scmp.ne.s32.totalorder %s150, %s151
      %p162 = scmp.eq.s32.totalorder %s22, 0
      %p163 = por %p161, %p162
      %p164 = scmp.ne.s32.totalorder %s150, %s151
      %p165 = scmp.eq.s32.totalorder %s23, 1
      %p166 = por %p164, %p165
      %p168 = scmp.ne.s32.totalorder %s151, %s167
      %p169 = scmp.eq.s32.totalorder %s23, 0
      %p170 = por %p168, %p169
      %p171 = scmp.le.s32.totalorder 1, %s17
      %p172 = scmp.lt.s32.totalorder %s17, 3
      %p173 = pnand %p171, %p172
      %p174 = pneg %p173
      // Predicated region
      $region9: #{tpu_custom_call.1} parent=5 // pred_check
        _
      $region10: #{tpu_custom_call.1} parent=5 // pred_check_branch
        %176 = sbr.rel (%p173) target = $region12
      $region11: #{tpu_custom_call.1} parent=5 // pred_region
        %s177 = ssub.s32 %s17, 1
      $region12: #{tpu_custom_call.1} parent=5 // pred_fallthru
        _
      %p178 = scmp.lt.s32.totalorder %s17, 2
      // Predicated region
      $region13: #{tpu_custom_call.1} parent=5 // pred_check
        %p179 = pneg %p178
      $region14: #{tpu_custom_call.1} parent=5 // pred_check_branch
        %181 = sbr.rel (%p179) target = $region16
      $region15: #{tpu_custom_call.1} parent=5 // pred_region
        // Predicated region
        $region17: #{tpu_custom_call.1} parent=15 // pred_check
          %p182 = pneg %p51
        $region18: #{tpu_custom_call.1} parent=15 // pred_check_branch
          %184 = sbr.rel (%p182) target = $region20
        $region19: #{tpu_custom_call.1} parent=15 // pred_region
          %s185 = sand.u32 %s41, 1
          %s186 = scalar_lea.sflag [#allocation6], %s185
          %s187 = sand.u32 %s41, 1
          %s188 = smul.addr %s187, 8
          %s189 = scalar_lea.vmem [#allocation5], %s188
          %s190 = smul.u32 2, %s25
          %s192 = ssub.s32 128, 128
          %193 = vsyncadd %s186, %s192
          %s194 = smul.addr %s24, 2
          %s195 = sadd.s32 %s190, %s194
          %s196 = smul.addr %s195, 64
          %s197 = scalar_lea.hbm %s0, %s196
          %s199 = sshll.u32 %s189, 4
          %s200 = int_to_ptr.vmem [resolvable:$true] %s199
          %202 = dma.hbm_to_vmem [thread:$0]  %s197, 128, %s200, %s186
        $region20: #{tpu_custom_call.1} parent=15 // pred_fallthru
          _
        // Predicated region
        $region21: #{tpu_custom_call.1} parent=15 // pred_check
          %p203 = pneg %p79
        $region22: #{tpu_custom_call.1} parent=15 // pred_check_branch
          %205 = sbr.rel (%p203) target = $region24
        $region23: #{tpu_custom_call.1} parent=15 // pred_region
          %s206 = sand.u32 %s69, 1
          %s207 = scalar_lea.sflag [#allocation8], %s206
          %s208 = sand.u32 %s69, 1
          %s209 = smul.addr %s208, 2
          %s210 = scalar_lea.vmem [#allocation7], %s209
          %s211 = smul.u32 2, %s25
          %s213 = ssub.s32 32, 32
          %214 = vsyncadd %s207, %s213
          %s215 = smul.addr %s24, 2
          %s216 = sadd.s32 %s211, %s215
          %s217 = smul.addr %s216, 16
          %s218 = scalar_lea.hbm %s1, %s217
          %s220 = sshll.u32 %s210, 4
          %s221 = int_to_ptr.vmem [resolvable:$true] %s220
          %223 = dma.hbm_to_vmem [thread:$0]  %s218, 32, %s221, %s207
        $region24: #{tpu_custom_call.1} parent=15 // pred_fallthru
          _
      $region16: #{tpu_custom_call.1} parent=5 // pred_fallthru
        _
      %p224 = scmp.le.s32.totalorder 1, %s17
      %p225 = scmp.lt.s32.totalorder %s17, 3
      %p226 = pnand %p224, %p225
      %p227 = pneg %p226
      // Predicated region
      $region25: #{tpu_custom_call.1} parent=5 // pred_check
        _
      $region26: #{tpu_custom_call.1} parent=5 // pred_check_branch
        %229 = sbr.rel (%p226) target = $region28
      $region27: #{tpu_custom_call.1} parent=5 // pred_region
        %s230 = ssub.s32 %s17, 1
        %s231 = sand.u32 %s44, 1
        %s232 = scalar_lea.sflag [#allocation6], %s231
        %s233 = sand.u32 %s44, 1
        %s234 = smul.addr %s233, 8
        %s235 = scalar_lea.vmem [#allocation5], %s234
        // Predicated region
        $region29: #{tpu_custom_call.1} parent=27 // pred_check
          %p236 = pneg %p57
        $region30: #{tpu_custom_call.1} parent=27 // pred_check_branch
          %238 = sbr.rel (%p236) target = $region32
        $region31: #{tpu_custom_call.1} parent=27 // pred_region
          %239 = dma.done %s232, 128
        $region32: #{tpu_custom_call.1} parent=27 // pred_fallthru
          _
        %s240 = sand.u32 %s72, 1
        %s241 = scalar_lea.sflag [#allocation8], %s240
        %s242 = sand.u32 %s72, 1
        %s243 = smul.addr %s242, 2
        %s244 = scalar_lea.vmem [#allocation7], %s243
        // Predicated region
        $region33: #{tpu_custom_call.1} parent=27 // pred_check
          %p245 = pneg %p85
        $region34: #{tpu_custom_call.1} parent=27 // pred_check_branch
          %247 = sbr.rel (%p245) target = $region36
        $region35: #{tpu_custom_call.1} parent=27 // pred_region
          %248 = dma.done %s241, 32
        $region36: #{tpu_custom_call.1} parent=27 // pred_fallthru
          _
        %s249 = sand.u32 %s44, 1
        %s250 = scalar_lea.sflag [#allocation6], %s249
        %s251 = sand.u32 %s44, 1
        %s252 = smul.addr %s251, 8
        %s253 = scalar_lea.vmem [#allocation5], %s252
        %p254 = pneg %p57
        %p255 = pneg %p54
        %s256 = sand.u32 %s72, 1
        %s257 = scalar_lea.sflag [#allocation8], %s256
        %s258 = sand.u32 %s72, 1
        %s259 = smul.addr %s258, 2
        %s260 = scalar_lea.vmem [#allocation7], %s259
        %p261 = pneg %p85
        %p262 = pneg %p82
        %p263 = pneg %p111
        %p264 = pneg %p108
        %p265 = scmp.lt.s32.totalorder %s26, 1
        %s266 = scalar_select %p265, %s26, 1
        %s267 = smul.addr %s266, 4
        %s268 = scalar_lea.vmem %s2, %s267
        %p269 = pneg %p137
        %p270 = pneg %p134
        %p271 = scmp.lt.s32.totalorder %s26, 1
        %s272 = scalar_select %p271, %s26, 1
        %s273 = smul.addr %s272, 4
        %s274 = scalar_lea.vmem %s3, %s273
        %p275 = pneg %p163
        %p276 = pneg %p160
        %p277 = scmp.lt.s32.totalorder %s26, 1
        %s278 = scalar_select %p277, %s26, 1
        %s279 = smul.addr %s278, 4
        %s280 = scalar_lea.vmem %s4, %s279
        %s281 = smul.u32 2, %s27
        %s282 = smul.u32 2, %s27
        %p283 = scmp.lt.s32.totalorder %s26, 1
        %s284 = scalar_select %p283, %s26, 1
        %s285 = smul.addr %s284, 4
        %s286 = scalar_lea.vmem %s2, %s285
        %p287 = scmp.lt.s32.totalorder %s26, 1
        %s288 = scalar_select %p287, %s26, 1
        %s289 = smul.addr %s288, 4
        %s290 = scalar_lea.vmem %s3, %s289
        %p291 = scmp.lt.s32.totalorder %s26, 1
        %s292 = scalar_select %p291, %s26, 1
        %s293 = smul.addr %s292, 4
        %s294 = scalar_lea.vmem %s4, %s293
        %p295 = scmp.eq.s32.totalorder %s27, 0
        // Predicated region
        $region37: #{tpu_custom_call.1} parent=27 // pred_check
          %p296 = pneg %p295
        $region38: #{tpu_custom_call.1} parent=27 // pred_check_branch
          %298 = sbr.rel (%p296) target = $region40
        $region39: #{tpu_custom_call.1} parent=27 // pred_region
          %299 = vst [vmem:[#allocation2] sm:$0xf] 0.0
          %300 = vst [vmem:[#allocation3] sm:$0xf] 0.0
          %301 = vst [vmem:[#allocation4] sm:$0xf] 0.0
        $region40: #{tpu_custom_call.1} parent=27 // pred_fallthru
          _
        %v302 = vld [vmem:[%s235] sm:$0xff]
        %v303 = vld [vmem:[%s244] sm:$0x3]
        %v305 = vcombine.high %v302, %v302
        %vm307 = vcmask 1043456
        %v308 = vsel %vm307, %v302, -inf
        %v309 = vrot.slane %v308, 4
        %v310 = vmax.f32 %v308, %v309
        %v311 = vrot.slane %v310, 2
        %v312 = vmax.f32 %v310, %v311
        %v313 = vrot.slane %v312, 1
        %v314 = vmax.f32 %v312, %v313
        %v315 = vsel %vm307, %v305, -inf
        %v316 = vrot.slane %v315, 4
        %v317 = vmax.f32 %v315, %v316
        %v318 = vrot.slane %v317, 2
        %v319 = vmax.f32 %v317, %v318
        %v320 = vrot.slane %v319, 1
        %v321 = vmax.f32 %v319, %v320
        %v324 = vcombine.low %v314, %v321
        %v326 = vsub.f32 %v302, %v324
        %v327 = vmul.f32 %v326, 1.442695
        %v328 = vpow.pop %v327
        %v330 = vcombine.high %v328, %v328
        %v332 = vsel %vm307, %v328, 0.0
        %v333 = vrot.slane %v332, 4
        %v334 = vadd.f32 %v332, %v333
        %v335 = vrot.slane %v334, 2
        %v336 = vadd.f32 %v334, %v335
        %v337 = vrot.slane %v336, 1
        %v338 = vadd.f32 %v336, %v337
        %v339 = vsel %vm307, %v330, 0.0
        %v340 = vrot.slane %v339, 4
        %v341 = vadd.f32 %v339, %v340
        %v342 = vrot.slane %v341, 2
        %v343 = vadd.f32 %v341, %v342
        %v344 = vrot.slane %v343, 1
        %v345 = vadd.f32 %v343, %v344
        %v346 = vrcp.pop %v338
        %v347 = vrcp.pop %v345
        %v350 = vcombine.low %v346, %v347
        %v352 = vmul.f32 %v328, %v350
        %v353 = vlaneseq
        %v354 = vshrl.u32 %v353, 7
        %v355 = vlaneseq
        %v356 = vshrl.u32 %v355, 7
        %v357 = vsub.s32 0, %v356
        %v358 = vrot.slane %v303, %v357
        %v359 = vlaneseq
        %v360 = vshrl.u32 %v359, 7
        %v361 = vsub.s32 1, %v360
        %v362 = vrot.slane %v303, %v361
        %vm363 = vcmp.eq.s32.totalorder %v358, %v354
        %vm364 = vcmp.eq.s32.totalorder %v362, %v354
        %v365 = vsel %vm363, 1, 0
        %v366 = vsel %vm364, 1, 0
        %v367 = vcvt.s32.f32 %v365
        %v368 = vcvt.s32.f32 %v366
        %v369 = vld [vmem:[#allocation2] sm:$0xf]
        %v370 = vadd.f32 %v367, %v368
        %v371 = vadd.f32 %v369, %v370
        %372 = vst [vmem:[#allocation2] sm:$0xf] %v371
        %v373 = vld [vmem:[#allocation3] sm:$0xf]
        %v376 = vcombine.low %v367, %v368
        %v378 = vmul.f32 %v352, %v376
        %v380 = vrot.slane %v378, 4
        %v382 = vadd.f32 %v378, %v380
        %v383 = vadd.f32 %v373, %v382
        %384 = vst [vmem:[#allocation3] sm:$0xf] %v383
        %v385 = vld [vmem:[#allocation4] sm:$0xf]
        %v387 = vrot.slane %v352, 4
        %v389 = vadd.f32 %v352, %v387
        %v390 = vadd.f32 %v385, %v389
        %391 = vst [vmem:[#allocation4] sm:$0xf] %v390
        // Predicated region
        $region41: #{tpu_custom_call.1} parent=27 // pred_check
          %p392 = pneg %p295
        $region42: #{tpu_custom_call.1} parent=27 // pred_check_branch
          %394 = sbr.rel (%p392) target = $region44
        $region43: #{tpu_custom_call.1} parent=27 // pred_region
          %v395 = vld [vmem:[#allocation2] sm:$0xf]
          %v396 = vsel %vm307, %v395, 0.0
          %397 = vadd.xlane.f32.xlu0 %v396
          %v398 = vpop.xlane.xlu0 %397
          %vm399 = vcmask 3072
          %400 = vst.msk [vmem:[%s286] sm:$0xf] %vm399, %v398
          %v401 = vld [vmem:[#allocation3] sm:$0xf]
          %v402 = vsel %vm307, %v401, 0.0
          %403 = vadd.xlane.f32.xlu0 %v402
          %v404 = vpop.xlane.xlu0 %403
          %405 = vst.msk [vmem:[%s290] sm:$0xf] %vm399, %v404
          %v406 = vld [vmem:[#allocation4] sm:$0xf]
          %v407 = vsel %vm307, %v406, 0.0
          %408 = vadd.xlane.f32.xlu0 %v407
          %v409 = vpop.xlane.xlu0 %408
          %410 = vst.msk [vmem:[%s294] sm:$0xf] %vm399, %v409
        $region44: #{tpu_custom_call.1} parent=27 // pred_fallthru
          _
        %p411 = scmp.lt.s32.totalorder %s26, 1
        %s412 = scalar_select %p411, %s26, 1
        %s413 = smul.addr %s412, 4
        %s414 = scalar_lea.vmem %s2, %s413
        %p415 = scmp.lt.s32.totalorder %s26, 1
        %s416 = scalar_select %p415, %s26, 1
        %s417 = smul.addr %s416, 4
        %s418 = scalar_lea.vmem %s3, %s417
        %p419 = scmp.lt.s32.totalorder %s26, 1
        %s420 = scalar_select %p419, %s26, 1
        %s421 = smul.addr %s420, 4
        %s422 = scalar_lea.vmem %s4, %s421
        // Predicated region
        $region45: #{tpu_custom_call.1} parent=27 // pred_check
          %p423 = pneg %p108
        $region46: #{tpu_custom_call.1} parent=27 // pred_check_branch
          %425 = sbr.rel (%p423) target = $region48
        $region47: #{tpu_custom_call.1} parent=27 // pred_region
          _
        $region48: #{tpu_custom_call.1} parent=27 // pred_fallthru
          _
        // Predicated region
        $region49: #{tpu_custom_call.1} parent=27 // pred_check
          %p426 = pneg %p134
        $region50: #{tpu_custom_call.1} parent=27 // pred_check_branch
          %428 = sbr.rel (%p426) target = $region52
        $region51: #{tpu_custom_call.1} parent=27 // pred_region
          _
        $region52: #{tpu_custom_call.1} parent=27 // pred_fallthru
          _
        // Predicated region
        $region53: #{tpu_custom_call.1} parent=27 // pred_check
          %p429 = pneg %p160
        $region54: #{tpu_custom_call.1} parent=27 // pred_check_branch
          %431 = sbr.rel (%p429) target = $region56
        $region55: #{tpu_custom_call.1} parent=27 // pred_region
          _
        $region56: #{tpu_custom_call.1} parent=27 // pred_fallthru
          _
      $region28: #{tpu_custom_call.1} parent=5 // pred_fallthru
        _
      %p432 = scmp.le.s32.totalorder 2, %s17
      // Predicated region
      $region57: #{tpu_custom_call.1} parent=5 // pred_check
        %p433 = pneg %p432
      $region58: #{tpu_custom_call.1} parent=5 // pred_check_branch
        %435 = sbr.rel (%p433) target = $region60
      $region59: #{tpu_custom_call.1} parent=5 // pred_region
        %s436 = ssub.s32 %s17, 2
        // Predicated region
        $region61: #{tpu_custom_call.1} parent=59 // pred_check
          %p437 = pneg %p114
        $region62: #{tpu_custom_call.1} parent=59 // pred_check_branch
          %439 = sbr.rel (%p437) target = $region64
        $region63: #{tpu_custom_call.1} parent=59 // pred_region
          %p440 = scmp.lt.s32.totalorder %s28, 1
          %s441 = scalar_select %p440, %s28, 1
          %s442 = smul.addr %s441, 4
          %s443 = scalar_lea.vmem %s2, %s442
        $region64: #{tpu_custom_call.1} parent=59 // pred_fallthru
          _
        // Predicated region
        $region65: #{tpu_custom_call.1} parent=59 // pred_check
          %p444 = pneg %p140
        $region66: #{tpu_custom_call.1} parent=59 // pred_check_branch
          %446 = sbr.rel (%p444) target = $region68
        $region67: #{tpu_custom_call.1} parent=59 // pred_region
          %p447 = scmp.lt.s32.totalorder %s28, 1
          %s448 = scalar_select %p447, %s28, 1
          %s449 = smul.addr %s448, 4
          %s450 = scalar_lea.vmem %s3, %s449
        $region68: #{tpu_custom_call.1} parent=59 // pred_fallthru
          _
        // Predicated region
        $region69: #{tpu_custom_call.1} parent=59 // pred_check
          %p451 = pneg %p166
        $region70: #{tpu_custom_call.1} parent=59 // pred_check_branch
          %453 = sbr.rel (%p451) target = $region72
        $region71: #{tpu_custom_call.1} parent=59 // pred_region
          %p454 = scmp.lt.s32.totalorder %s28, 1
          %s455 = scalar_select %p454, %s28, 1
          %s456 = smul.addr %s455, 4
          %s457 = scalar_lea.vmem %s4, %s456
        $region72: #{tpu_custom_call.1} parent=59 // pred_fallthru
          _
      $region60: #{tpu_custom_call.1} parent=5 // pred_fallthru
        _
    $region6: #{tpu_custom_call.1} parent=1 // loop_footer
      %s21 = sadd.s32 1, %s17
    $region7: #{tpu_custom_call.1} parent=1 // loop_footer_branch
      %16 = sbr.rel target = $region3
    $region8: #{tpu_custom_call.1} parent=1 // loop_exit
      _
    %458 = vsyncpa [#allocation6], 1
    %s459 = scalar_lea.sflag [#allocation6], 1
    %460 = vsyncpa %s459, 1
    %461 = vsyncpa [#allocation8], 1
    %s462 = scalar_lea.sflag [#allocation8], 1
    %463 = vsyncpa %s462, 1

</llo_original>
